<compile_context>
chip_gen: v6e
topology: v6e:2x2x1
jax: 0.10.0
libtpu: 0.0.40
codegen_flags: <defaults>
</compile_context>

<pallas_src>
import jax
import jax.numpy as jnp
from jax.experimental import pallas as pl
from jax.experimental.pallas import tpu as pltpu

_LN_EPS = 1e-5


def projection_head_kernel(x_ref, w1_ref, ln_ref, w2_ref, b2_ref, o_ref, acc_ref):
    """One (batch-tile, k-tile) grid step.

    grid = (num_batch_tiles, num_k_tiles); K (D_in) axis is last and "arbitrary".
    acc_ref: (TB, H) f32 VMEM accumulator, lives across the K axis.
    """
    k = pl.program_id(1)

    @pl.when(k == 0)
    def _():
        acc_ref[...] = jnp.zeros_like(acc_ref)

    # layer1 partial product on the MXU (inputs in param dtype, f32 accumulation).
    acc_ref[...] += jnp.dot(x_ref[...], w1_ref[...],
                            preferred_element_type=jnp.float32)

    @pl.when(k == pl.num_programs(1) - 1)
    def _():
        # Static row slices of the merged (3, H) param slab: [b1; gamma; beta].
        b1 = ln_ref[0:1, :]
        gamma = ln_ref[1:2, :]
        beta = ln_ref[2:3, :]

        h = acc_ref[...] + b1

        # LayerNorm over the hidden axis; one-pass variance, f32 statistics.
        mean = jnp.mean(h, axis=-1, keepdims=True)
        var = jnp.mean(h * h, axis=-1, keepdims=True) - mean * mean
        var = jnp.maximum(var, 0.0)
        h = (h - mean) * jax.lax.rsqrt(var + _LN_EPS)
        h = h * gamma + beta

        # ReLU
        h = jnp.maximum(h, 0.0)

        # layer2 (cast to weight dtype for MXU input, f32 accumulation).
        out = jnp.dot(h.astype(w2_ref.dtype), w2_ref[...],
                      preferred_element_type=jnp.float32)
        o_ref[...] = (out + b2_ref[...]).astype(o_ref.dtype)


def projection_head(x, w1, b1, gamma, beta, w2, b2, *,
                    compute_dtype=jnp.bfloat16, k_tile=None):
    """x: [B, D_in] -> [B, D_out].

    compute_dtype: dtype for the matmul inputs (x, w1, w2); default bfloat16.
    LayerNorm statistics and all accumulation stay in float32.
    k_tile: optional explicit K (D_in) tile size; must divide D_in.
    """
    B, D_in = x.shape
    H = w1.shape[1]
    D_out = w2.shape[1]
    out_dtype = x.dtype

    if compute_dtype is not None:
        x = x.astype(compute_dtype)
        w1 = w1.astype(compute_dtype)
        w2 = w2.astype(compute_dtype)

    act_b = jnp.dtype(x.dtype).itemsize
    w_b = jnp.dtype(w1.dtype).itemsize
    out_b = jnp.dtype(out_dtype).itemsize

    # ---- lane-dense output: pad D_out up to a multiple of 128 (zero columns, cheap) ----
    D_outp = max(pl.cdiv(D_out, 128) * 128, 128)
    if D_outp != D_out:
        w2 = jnp.pad(w2, ((0, 0), (0, D_outp - D_out)))
        b2 = jnp.pad(b2, ((0, D_outp - D_out),))

    # Merge LN/bias params into one resident (3, H) f32 slab (fewer DMA descriptors).
    ln3 = jnp.stack([b1, gamma, beta]).astype(jnp.float32)
    b2_2d = b2.astype(jnp.float32).reshape(1, D_outp)

    # ---- chip-aware VMEM cap (v7x: 64 MiB physical -> ~40 MiB; v5e/v6e: 128 -> ~96) ----
    try:
        vmem_cap = int(getattr(pltpu.get_tpu_info(), "vmem_capacity_bytes", 64 << 20))
    except Exception:
        vmem_cap = 64 << 20
    cap = max(min(int(vmem_cap * 0.75), vmem_cap - (24 << 20)), 16 << 20)

    # ---- K (D_in) tiling: only when the full w1 slab would crowd VMEM ----
    if k_tile is not None:
        TK = int(k_tile)
        if D_in % TK != 0:
            raise ValueError("k_tile must divide D_in")
    elif D_in % 128 == 0 and D_in * H * w_b > cap // 3:
        TK = D_in
        for cand in (1024, 512, 256, 128):
            if D_in % cand == 0:
                TK = cand
                break
    else:
        TK = D_in
    nk = D_in // TK

    def needed_vmem(tb):
        x_buf = 2 * tb * TK * act_b                       # double-buffered x tile
        w1_buf = (1 if nk == 1 else 2) * TK * H * w_b     # resident or K-streamed
        res = H * D_outp * w_b + (3 * H + D_outp) * 4     # single-buffered residents
        out_buf = 2 * tb * D_outp * out_b
        acc = tb * H * 4
        temps = 2 * tb * H * 4                            # live f32 LN/ReLU intermediates
        return x_buf + w1_buf + res + out_buf + acc + temps

    # ---- batch tiling: biggest of 512/256/128 that fits the VMEM budget ----
    if B >= 128:
        TB = 128
        for cand in (512, 256, 128):
            if cand <= B and int(needed_vmem(cand) * 1.4) <= cap:
                TB = cand
                break
    else:
        TB = B              # single (possibly small) batch block
    nb = pl.cdiv(B, TB)

    vmem_limit = min(max(int(needed_vmem(TB) * 1.5), 8 << 20), cap)

    cost = pl.CostEstimate(
        flops=2 * B * (D_in * H + H * D_outp) + 10 * B * H,
        transcendentals=B,                                 # one rsqrt per row
        bytes_accessed=(B * D_in * act_b
                        + nb * D_in * H * w_b
                        + H * D_outp * w_b + (3 * H + D_outp) * 4
                        + B * D_outp * out_b),
    )

    def make_call(single_buffer_residents):
        def resident(shape):
            kw = {}
            if single_buffer_residents:
                kw["pipeline_mode"] = pl.Buffered(1)       # never re-fetched -> 1 buffer
            return pl.BlockSpec(shape, lambda i, k: (0,) * len(shape), **kw)

        if nk == 1:
            w1_spec = resident((TK, H))                    # w1 fully resident
        else:
            w1_spec = pl.BlockSpec((TK, H), lambda i, k: (k, 0))   # streamed over K

        in_specs = [
            pl.BlockSpec((TB, TK), lambda i, k: (i, k)),   # x tile (pipelined)
            w1_spec,
            resident((3, H)),                              # [b1; gamma; beta]
            resident((H, D_outp)),                         # w2
            resident((1, D_outp)),                         # b2
        ]
        out_spec = pl.BlockSpec((TB, D_outp), lambda i, k: (i, 0))

        return pl.pallas_call(
            projection_head_kernel,
            out_shape=jax.ShapeDtypeStruct((B, D_outp), out_dtype),
            grid=(nb, nk),
            in_specs=in_specs,
            out_specs=out_spec,
            scratch_shapes=[pltpu.VMEM((TB, H), jnp.float32)],
            compiler_params=pltpu.CompilerParams(
                dimension_semantics=("parallel", "arbitrary"),
                vmem_limit_bytes=vmem_limit,
            ),
            cost_estimate=cost,
        )

    args = (x, w1, ln3, w2, b2_2d)
    try:
        out = make_call(True)(*args)
    except Exception:
        # Fallback if this JAX build rejects single-buffered resident BlockSpecs.
        out = make_call(False)(*args)

    return out if D_outp == D_out else out[:, :D_out]


def projection_head_ref(x, w1, b1, gamma, beta, w2, b2):
    hp = jax.lax.Precision.HIGHEST
    h = jnp.dot(x, w1, precision=hp) + b1
    mean = h.mean(-1, keepdims=True)
    var = ((h - mean) ** 2).mean(-1, keepdims=True)
    h = (h - mean) / jnp.sqrt(var + _LN_EPS)
    h = h * gamma + beta
    h = jnp.maximum(h, 0.0)
    return jnp.dot(h, w2, precision=hp) + b2


if __name__ == "__main__":
    key = jax.random.PRNGKey(0)

    def make_params(k, d_in, hidden, d_out):
        kx, kw1, kb1, kw2, kb2 = jax.random.split(k, 5)
        lim1 = 1.0 / (d_in ** 0.5)
        w1 = jax.random.uniform(kw1, (d_in, hidden), jnp.float32, -lim1, lim1)
        b1 = jax.random.uniform(kb1, (hidden,), jnp.float32, -lim1, lim1)
        lim2 = 1.0 / (hidden ** 0.5)
        w2 = jax.random.uniform(kw2, (hidden, d_out), jnp.float32, -lim2, lim2)
        b2 = jax.random.uniform(kb2, (d_out,), jnp.float32, -lim2, lim2)
        gamma = jnp.ones((hidden,), jnp.float32)   # torch LayerNorm init
        beta = jnp.zeros((hidden,), jnp.float32)
        return kx, w1, b1, gamma, beta, w2, b2

    k1, k2 = jax.random.split(key)

    # ---- Test 1: small batch, single K slab (B=2, D_in=32, H=256, D_out=128) ----
    kx, w1, b1, gamma, beta, w2, b2 = make_params(k1, 32, 256, 128)
    x = jax.random.normal(kx, (2, 32), dtype=jnp.float32)
    ref = projection_head_ref(x, w1, b1, gamma, beta, w2, b2)

    out_f32 = jax.block_until_ready(
        projection_head(x, w1, b1, gamma, beta, w2, b2, compute_dtype=jnp.float32))
    assert out_f32.shape == ref.shape
    assert jnp.allclose(out_f32, ref, atol=2e-3, rtol=2e-3), "f32 path mismatch vs reference"

    out_bf16 = jax.block_until_ready(
        projection_head(x, w1, b1, gamma, beta, w2, b2))   # default bf16 MXU inputs
    assert out_bf16.shape == ref.shape
    assert jnp.allclose(out_bf16, ref, atol=1e-1, rtol=1e-1), "bf16 path diverged"

    # ---- Test 2: K-tiled reduction + lane-dense output padding (D_out=64 -> 128) ----
    kx, w1, b1, gamma, beta, w2, b2 = make_params(k2, 256, 128, 64)
    x = jax.random.normal(kx, (16, 256), dtype=jnp.float32)
    ref = projection_head_ref(x, w1, b1, gamma, beta, w2, b2)
    out_kt = jax.block_until_ready(
        projection_head(x, w1, b1, gamma, beta, w2, b2,
                        compute_dtype=jnp.float32, k_tile=128))
    assert out_kt.shape == ref.shape
    assert jnp.allclose(out_kt, ref, atol=2e-3, rtol=2e-3), "k-tiled path mismatch"

    print("KERNEL_OK")
</pallas_src>

<mosaic_0001>
module attributes {stable_mosaic.version = 11 : i64} {
  func.func @projection_head_kernel(%arg0: i32, %arg1: i32, %arg2: memref<2x32xf32, #tpu.memory_space<vmem>>, %arg3: memref<32x256xf32, #tpu.memory_space<vmem>>, %arg4: memref<3x256xf32, #tpu.memory_space<vmem>>, %arg5: memref<256x128xf32, #tpu.memory_space<vmem>>, %arg6: memref<1x128xf32, #tpu.memory_space<vmem>>, %arg7: memref<2x128xf32, #tpu.memory_space<vmem>>, %arg8: memref<2x256xf32, #tpu.memory_space<vmem>>) attributes {dimension_semantics = [#tpu.dimension_semantics<parallel>, #tpu.dimension_semantics<arbitrary>], iteration_bounds = array<i64: 1, 1>, scalar_prefetch = 0 : i64, scratch_operands = 1 : i64, tpu.core_type = #tpu.core_type<tc>, window_params = [{transform_indices = @transform_0, window_bounds = array<i64: 2, 32>}, {pipeline_mode = #tpu.pipeline_mode<synchronous>, transform_indices = @transform_1, window_bounds = array<i64: 32, 256>}, {pipeline_mode = #tpu.pipeline_mode<synchronous>, transform_indices = @transform_2, window_bounds = array<i64: 3, 256>}, {pipeline_mode = #tpu.pipeline_mode<synchronous>, transform_indices = @transform_3, window_bounds = array<i64: 256, 128>}, {pipeline_mode = #tpu.pipeline_mode<synchronous>, transform_indices = @transform_4, window_bounds = array<i64: 1, 128>}, {transform_indices = @transform_5, window_bounds = array<i64: 2, 128>}]} {
    %c0_i32 = arith.constant 0 : i32
    %0 = arith.cmpi eq, %arg1, %c0_i32 : i32
    %1 = arith.extui %0 : i1 to i32
    %c0_i32_0 = arith.constant 0 : i32
    %2 = arith.cmpi ne, %1, %c0_i32_0 : i32
    scf.if %2 {
      %cst_10 = arith.constant 0.000000e+00 : f32
      %12 = vector.broadcast %cst_10 : f32 to vector<2x256xf32>
      %c0_11 = arith.constant 0 : index
      %c0_12 = arith.constant 0 : index
      %13 = vector.load %arg8[%c0_11, %c0_12] : memref<2x256xf32, #tpu.memory_space<vmem>>, vector<2x256xf32>
      tpu.vector_store %arg8[%c0_11, %c0_12], %12 {strides = array<i32>} : memref<2x256xf32, #tpu.memory_space<vmem>>, vector<2x256xf32>,
    } else {
    }
    %c0 = arith.constant 0 : index
    %c0_1 = arith.constant 0 : index
    %3 = vector.load %arg8[%c0, %c0_1] : memref<2x256xf32, #tpu.memory_space<vmem>>, vector<2x256xf32>
    %c0_2 = arith.constant 0 : index
    %c0_3 = arith.constant 0 : index
    %4 = vector.load %arg2[%c0_2, %c0_3] : memref<2x32xf32, #tpu.memory_space<vmem>>, vector<2x32xf32>
    %c0_4 = arith.constant 0 : index
    %c0_5 = arith.constant 0 : index
    %5 = vector.load %arg3[%c0_4, %c0_5] : memref<32x256xf32, #tpu.memory_space<vmem>>, vector<32x256xf32>
    %cst = arith.constant dense<0.000000e+00> : vector<2x256xf32>
    %6 = tpu.matmul %4, %5, %cst {dimension_numbers = #tpu.dot_dimension_numbers<[1], [0], [0], [1], [0, 0, 1, 1], [], []>} : vector<2x32xf32>, vector<32x256xf32>, vector<2x256xf32> -> vector<2x256xf32>
    %7 = arith.addf %3, %6 : vector<2x256xf32>
    %c0_6 = arith.constant 0 : index
    %c0_7 = arith.constant 0 : index
    %8 = vector.load %arg8[%c0_6, %c0_7] : memref<2x256xf32, #tpu.memory_space<vmem>>, vector<2x256xf32>
    tpu.vector_store %arg8[%c0_6, %c0_7], %7 {strides = array<i32>} : memref<2x256xf32, #tpu.memory_space<vmem>>, vector<2x256xf32>,
    %c0_i32_8 = arith.constant 0 : i32
    %9 = arith.cmpi eq, %arg1, %c0_i32_8 : i32
    %10 = arith.extui %9 : i1 to i32
    %c0_i32_9 = arith.constant 0 : i32
    %11 = arith.cmpi ne, %10, %c0_i32_9 : i32
    scf.if %11 {
      %c0_10 = arith.constant 0 : index
      %c0_11 = arith.constant 0 : index
      %12 = vector.load %arg4[%c0_10, %c0_11] : memref<3x256xf32, #tpu.memory_space<vmem>>, vector<1x256xf32>
      %c1 = arith.constant 1 : index
      %c0_12 = arith.constant 0 : index
      %13 = vector.load %arg4[%c1, %c0_12] : memref<3x256xf32, #tpu.memory_space<vmem>>, vector<1x256xf32>
      %c2 = arith.constant 2 : index
      %c0_13 = arith.constant 0 : index
      %14 = vector.load %arg4[%c2, %c0_13] : memref<3x256xf32, #tpu.memory_space<vmem>>, vector<1x256xf32>
      %c0_14 = arith.constant 0 : index
      %c0_15 = arith.constant 0 : index
      %15 = vector.load %arg8[%c0_14, %c0_15] : memref<2x256xf32, #tpu.memory_space<vmem>>, vector<2x256xf32>
      %16 = vector.broadcast %12 : vector<1x256xf32> to vector<2x256xf32>
      %17 = arith.addf %15, %16 : vector<2x256xf32>
      %cst_16 = arith.constant dense<0.000000e+00> : vector<2xf32>
      %18 = vector.multi_reduction <add>, %17, %cst_16 [1] : vector<2x256xf32> to vector<2xf32>
      %19 = vector.shape_cast %18 : vector<2xf32> to vector<2x1xf32>
      %cst_17 = arith.constant 2.560000e+02 : f32
      %20 = vector.broadcast %cst_17 : f32 to vector<2x1xf32>
      %21 = arith.divf %19, %20 : vector<2x1xf32>
      %22 = arith.mulf %17, %17 : vector<2x256xf32>
      %cst_18 = arith.constant dense<0.000000e+00> : vector<2xf32>
      %23 = vector.multi_reduction <add>, %22, %cst_18 [1] : vector<2x256xf32> to vector<2xf32>
      %24 = vector.shape_cast %23 : vector<2xf32> to vector<2x1xf32>
      %cst_19 = arith.constant 2.560000e+02 : f32
      %25 = vector.broadcast %cst_19 : f32 to vector<2x1xf32>
      %26 = arith.divf %24, %25 : vector<2x1xf32>
      %27 = arith.mulf %21, %21 : vector<2x1xf32>
      %28 = arith.subf %26, %27 : vector<2x1xf32>
      %cst_20 = arith.constant 0.000000e+00 : f32
      %29 = vector.broadcast %cst_20 : f32 to vector<2x1xf32>
      %30 = arith.maximumf %28, %29 : vector<2x1xf32>
      %31 = vector.broadcast %21 : vector<2x1xf32> to vector<2x256xf32>
      %32 = arith.subf %17, %31 : vector<2x256xf32>
      %cst_21 = arith.constant 9.99999974E-6 : f32
      %33 = vector.broadcast %cst_21 : f32 to vector<2x1xf32>
      %34 = arith.addf %30, %33 : vector<2x1xf32>
      %35 = math.rsqrt %34 : vector<2x1xf32>
      %36 = vector.broadcast %35 : vector<2x1xf32> to vector<2x256xf32>
      %37 = arith.mulf %32, %36 : vector<2x256xf32>
      %38 = vector.broadcast %13 : vector<1x256xf32> to vector<2x256xf32>
      %39 = arith.mulf %37, %38 : vector<2x256xf32>
      %40 = vector.broadcast %14 : vector<1x256xf32> to vector<2x256xf32>
      %41 = arith.addf %39, %40 : vector<2x256xf32>
      %cst_22 = arith.constant 0.000000e+00 : f32
      %42 = vector.broadcast %cst_22 : f32 to vector<2x256xf32>
      %43 = arith.maximumf %41, %42 : vector<2x256xf32>
      %c0_23 = arith.constant 0 : index
      %c0_24 = arith.constant 0 : index
      %44 = vector.load %arg5[%c0_23, %c0_24] : memref<256x128xf32, #tpu.memory_space<vmem>>, vector<256x128xf32>
      %cst_25 = arith.constant dense<0.000000e+00> : vector<2x128xf32>
      %45 = tpu.matmul %43, %44, %cst_25 {dimension_numbers = #tpu.dot_dimension_numbers<[1], [0], [0], [1], [0, 0, 1, 1], [], []>} : vector<2x256xf32>, vector<256x128xf32>, vector<2x128xf32> -> vector<2x128xf32>
      %c0_26 = arith.constant 0 : index
      %c0_27 = arith.constant 0 : index
      %46 = vector.load %arg6[%c0_26, %c0_27] : memref<1x128xf32, #tpu.memory_space<vmem>>, vector<1x128xf32>
      %47 = vector.broadcast %46 : vector<1x128xf32> to vector<2x128xf32>
      %48 = arith.addf %45, %47 : vector<2x128xf32>
      %c0_28 = arith.constant 0 : index
      %c0_29 = arith.constant 0 : index
      %49 = vector.load %arg7[%c0_28, %c0_29] : memref<2x128xf32, #tpu.memory_space<vmem>>, vector<2x128xf32>
      tpu.vector_store %arg7[%c0_28, %c0_29], %48 {strides = array<i32>} : memref<2x128xf32, #tpu.memory_space<vmem>>, vector<2x128xf32>,
    } else {
    }
    return
  }
  func.func @transform_0(%arg0: i32, %arg1: i32) -> (i32, i32) {
    %c0_i32 = arith.constant 0 : i32
    return %arg0, %arg1 : i32, i32
  }
  func.func @transform_1(%arg0: i32, %arg1: i32) -> (i32, i32) {
    %c0_i32 = arith.constant 0 : i32
    %c0_i32_0 = arith.constant 0 : i32
    %c0_i32_1 = arith.constant 0 : i32
    return %c0_i32, %c0_i32_0 : i32, i32
  }
  func.func @transform_2(%arg0: i32, %arg1: i32) -> (i32, i32) {
    %c0_i32 = arith.constant 0 : i32
    %c0_i32_0 = arith.constant 0 : i32
    %c0_i32_1 = arith.constant 0 : i32
    return %c0_i32, %c0_i32_0 : i32, i32
  }
  func.func @transform_3(%arg0: i32, %arg1: i32) -> (i32, i32) {
    %c0_i32 = arith.constant 0 : i32
    %c0_i32_0 = arith.constant 0 : i32
    %c0_i32_1 = arith.constant 0 : i32
    return %c0_i32, %c0_i32_0 : i32, i32
  }
  func.func @transform_4(%arg0: i32, %arg1: i32) -> (i32, i32) {
    %c0_i32 = arith.constant 0 : i32
    %c0_i32_0 = arith.constant 0 : i32
    %c0_i32_1 = arith.constant 0 : i32
    return %c0_i32, %c0_i32_0 : i32, i32
  }
  func.func @transform_5(%arg0: i32, %arg1: i32) -> (i32, i32) {
    %c0_i32 = arith.constant 0 : i32
    %c0_i32_0 = arith.constant 0 : i32
    return %arg0, %c0_i32 : i32, i32
  }
}

module attributes {stable_mosaic.version = 11 : i64} {
  func.func @projection_head_kernel(%arg0: i32, %arg1: i32, %arg2: memref<2x32xf32, #tpu.memory_space<vmem>>, %arg3: memref<32x256xf32, #tpu.memory_space<vmem>>, %arg4: memref<3x256xf32, #tpu.memory_space<vmem>>, %arg5: memref<256x128xf32, #tpu.memory_space<vmem>>, %arg6: memref<1x128xf32, #tpu.memory_space<vmem>>, %arg7: memref<2x128xf32, #tpu.memory_space<vmem>>, %arg8: memref<2x256xf32, #tpu.memory_space<vmem>>) attributes {dimension_semantics = [#tpu.dimension_semantics<parallel>, #tpu.dimension_semantics<arbitrary>], iteration_bounds = array<i64: 1, 1>, scalar_prefetch = 0 : i64, scratch_operands = 1 : i64, tpu.core_type = #tpu.core_type<tc>, window_params = [{transform_indices = @transform_0, window_bounds = array<i64: 2, 32>}, {pipeline_mode = #tpu.pipeline_mode<synchronous>, transform_indices = @transform_1, window_bounds = array<i64: 32, 256>}, {pipeline_mode = #tpu.pipeline_mode<synchronous>, transform_indices = @transform_2, window_bounds = array<i64: 3, 256>}, {pipeline_mode = #tpu.pipeline_mode<synchronous>, transform_indices = @transform_3, window_bounds = array<i64: 256, 128>}, {pipeline_mode = #tpu.pipeline_mode<synchronous>, transform_indices = @transform_4, window_bounds = array<i64: 1, 128>}, {transform_indices = @transform_5, window_bounds = array<i64: 2, 128>}]} {
    %c0_i32 = arith.constant 0 : i32
    %0 = arith.cmpi eq, %arg1, %c0_i32 : i32
    %1 = arith.extui %0 : i1 to i32
    %c0_i32_0 = arith.constant 0 : i32
    %2 = arith.cmpi ne, %1, %c0_i32_0 : i32
    scf.if %2 {
      %cst_10 = arith.constant 0.000000e+00 : f32
      %12 = vector.broadcast %cst_10 : f32 to vector<2x256xf32>
      %c0_11 = arith.constant 0 : index
      %c0_12 = arith.constant 0 : index
      %13 = vector.load %arg8[%c0_11, %c0_12] : memref<2x256xf32, #tpu.memory_space<vmem>>, vector<2x256xf32>
      tpu.vector_store %arg8[%c0_11, %c0_12], %12 {strides = array<i32>} : memref<2x256xf32, #tpu.memory_space<vmem>>, vector<2x256xf32>,
    } else {
    }
    %c0 = arith.constant 0 : index
    %c0_1 = arith.constant 0 : index
    %3 = vector.load %arg8[%c0, %c0_1] : memref<2x256xf32, #tpu.memory_space<vmem>>, vector<2x256xf32>
    %c0_2 = arith.constant 0 : index
    %c0_3 = arith.constant 0 : index
    %4 = vector.load %arg2[%c0_2, %c0_3] : memref<2x32xf32, #tpu.memory_space<vmem>>, vector<2x32xf32>
    %c0_4 = arith.constant 0 : index
    %c0_5 = arith.constant 0 : index
    %5 = vector.load %arg3[%c0_4, %c0_5] : memref<32x256xf32, #tpu.memory_space<vmem>>, vector<32x256xf32>
    %cst = arith.constant dense<0.000000e+00> : vector<2x256xf32>
    %6 = tpu.matmul %4, %5, %cst {dimension_numbers = #tpu.dot_dimension_numbers<[1], [0], [0], [1], [0, 0, 1, 1], [], []>} : vector<2x32xf32>, vector<32x256xf32>, vector<2x256xf32> -> vector<2x256xf32>
    %7 = arith.addf %3, %6 : vector<2x256xf32>
    %c0_6 = arith.constant 0 : index
    %c0_7 = arith.constant 0 : index
    %8 = vector.load %arg8[%c0_6, %c0_7] : memref<2x256xf32, #tpu.memory_space<vmem>>, vector<2x256xf32>
    tpu.vector_store %arg8[%c0_6, %c0_7], %7 {strides = array<i32>} : memref<2x256xf32, #tpu.memory_space<vmem>>, vector<2x256xf32>,
    %c0_i32_8 = arith.constant 0 : i32
    %9 = arith.cmpi eq, %arg1, %c0_i32_8 : i32
    %10 = arith.extui %9 : i1 to i32
    %c0_i32_9 = arith.constant 0 : i32
    %11 = arith.cmpi ne, %10, %c0_i32_9 : i32
    scf.if %11 {
      %c0_10 = arith.constant 0 : index
      %c0_11 = arith.constant 0 : index
      %12 = vector.load %arg4[%c0_10, %c0_11] : memref<3x256xf32, #tpu.memory_space<vmem>>, vector<1x256xf32>
      %c1 = arith.constant 1 : index
      %c0_12 = arith.constant 0 : index
      %13 = vector.load %arg4[%c1, %c0_12] : memref<3x256xf32, #tpu.memory_space<vmem>>, vector<1x256xf32>
      %c2 = arith.constant 2 : index
      %c0_13 = arith.constant 0 : index
      %14 = vector.load %arg4[%c2, %c0_13] : memref<3x256xf32, #tpu.memory_space<vmem>>, vector<1x256xf32>
      %c0_14 = arith.constant 0 : index
      %c0_15 = arith.constant 0 : index
      %15 = vector.load %arg8[%c0_14, %c0_15] : memref<2x256xf32, #tpu.memory_space<vmem>>, vector<2x256xf32>
      %16 = vector.broadcast %12 : vector<1x256xf32> to vector<2x256xf32>
      %17 = arith.addf %15, %16 : vector<2x256xf32>
      %cst_16 = arith.constant dense<0.000000e+00> : vector<2xf32>
      %18 = vector.multi_reduction <add>, %17, %cst_16 [1] : vector<2x256xf32> to vector<2xf32>
      %19 = vector.shape_cast %18 : vector<2xf32> to vector<2x1xf32>
      %cst_17 = arith.constant 2.560000e+02 : f32
      %20 = vector.broadcast %cst_17 : f32 to vector<2x1xf32>
      %21 = arith.divf %19, %20 : vector<2x1xf32>
      %22 = arith.mulf %17, %17 : vector<2x256xf32>
      %cst_18 = arith.constant dense<0.000000e+00> : vector<2xf32>
      %23 = vector.multi_reduction <add>, %22, %cst_18 [1] : vector<2x256xf32> to vector<2xf32>
      %24 = vector.shape_cast %23 : vector<2xf32> to vector<2x1xf32>
      %cst_19 = arith.constant 2.560000e+02 : f32
      %25 = vector.broadcast %cst_19 : f32 to vector<2x1xf32>
      %26 = arith.divf %24, %25 : vector<2x1xf32>
      %27 = arith.mulf %21, %21 : vector<2x1xf32>
      %28 = arith.subf %26, %27 : vector<2x1xf32>
      %cst_20 = arith.constant 0.000000e+00 : f32
      %29 = vector.broadcast %cst_20 : f32 to vector<2x1xf32>
      %30 = arith.maximumf %28, %29 : vector<2x1xf32>
      %31 = vector.broadcast %21 : vector<2x1xf32> to vector<2x256xf32>
      %32 = arith.subf %17, %31 : vector<2x256xf32>
      %cst_21 = arith.constant 9.99999974E-6 : f32
      %33 = vector.broadcast %cst_21 : f32 to vector<2x1xf32>
      %34 = arith.addf %30, %33 : vector<2x1xf32>
      %35 = math.rsqrt %34 : vector<2x1xf32>
      %36 = vector.broadcast %35 : vector<2x1xf32> to vector<2x256xf32>
      %37 = arith.mulf %32, %36 : vector<2x256xf32>
      %38 = vector.broadcast %13 : vector<1x256xf32> to vector<2x256xf32>
      %39 = arith.mulf %37, %38 : vector<2x256xf32>
      %40 = vector.broadcast %14 : vector<1x256xf32> to vector<2x256xf32>
      %41 = arith.addf %39, %40 : vector<2x256xf32>
      %cst_22 = arith.constant 0.000000e+00 : f32
      %42 = vector.broadcast %cst_22 : f32 to vector<2x256xf32>
      %43 = arith.maximumf %41, %42 : vector<2x256xf32>
      %c0_23 = arith.constant 0 : index
      %c0_24 = arith.constant 0 : index
      %44 = vector.load %arg5[%c0_23, %c0_24] : memref<256x128xf32, #tpu.memory_space<vmem>>, vector<256x128xf32>
      %cst_25 = arith.constant dense<0.000000e+00> : vector<2x128xf32>
      %45 = tpu.matmul %43, %44, %cst_25 {dimension_numbers = #tpu.dot_dimension_numbers<[1], [0], [0], [1], [0, 0, 1, 1], [], []>} : vector<2x256xf32>, vector<256x128xf32>, vector<2x128xf32> -> vector<2x128xf32>
      %c0_26 = arith.constant 0 : index
      %c0_27 = arith.constant 0 : index
      %46 = vector.load %arg6[%c0_26, %c0_27] : memref<1x128xf32, #tpu.memory_space<vmem>>, vector<1x128xf32>
      %47 = vector.broadcast %46 : vector<1x128xf32> to vector<2x128xf32>
      %48 = arith.addf %45, %47 : vector<2x128xf32>
      %c0_28 = arith.constant 0 : index
      %c0_29 = arith.constant 0 : index
      %49 = vector.load %arg7[%c0_28, %c0_29] : memref<2x128xf32, #tpu.memory_space<vmem>>, vector<2x128xf32>
      tpu.vector_store %arg7[%c0_28, %c0_29], %48 {strides = array<i32>} : memref<2x128xf32, #tpu.memory_space<vmem>>, vector<2x128xf32>,
    } else {
    }
    return
  }
  func.func @transform_0(%arg0: i32, %arg1: i32) -> (i32, i32) {
    %c0_i32 = arith.constant 0 : i32
    return %arg0, %arg1 : i32, i32
  }
  func.func @transform_1(%arg0: i32, %arg1: i32) -> (i32, i32) {
    %c0_i32 = arith.constant 0 : i32
    %c0_i32_0 = arith.constant 0 : i32
    %c0_i32_1 = arith.constant 0 : i32
    return %c0_i32, %c0_i32_0 : i32, i32
  }
  func.func @transform_2(%arg0: i32, %arg1: i32) -> (i32, i32) {
    %c0_i32 = arith.constant 0 : i32
    %c0_i32_0 = arith.constant 0 : i32
    %c0_i32_1 = arith.constant 0 : i32
    return %c0_i32, %c0_i32_0 : i32, i32
  }
  func.func @transform_3(%arg0: i32, %arg1: i32) -> (i32, i32) {
    %c0_i32 = arith.constant 0 : i32
    %c0_i32_0 = arith.constant 0 : i32
    %c0_i32_1 = arith.constant 0 : i32
    return %c0_i32, %c0_i32_0 : i32, i32
  }
  func.func @transform_4(%arg0: i32, %arg1: i32) -> (i32, i32) {
    %c0_i32 = arith.constant 0 : i32
    %c0_i32_0 = arith.constant 0 : i32
    %c0_i32_1 = arith.constant 0 : i32
    return %c0_i32, %c0_i32_0 : i32, i32
  }
  func.func @transform_5(%arg0: i32, %arg1: i32) -> (i32, i32) {
    %c0_i32 = arith.constant 0 : i32
    %c0_i32_0 = arith.constant 0 : i32
    return %arg0, %c0_i32 : i32, i32
  }
}

</mosaic_0001>

<llo_original>
// kernel: tpu_custom_call.1
$region0: #{tpu_custom_call.1}
  #allocation0 [shape = 'u32[]', space=smem, size = 0x4, offset = 0x4, fixed_abs, tag = 'smem constant byte address 0x4 - core index']
  #allocation1 [shape = 'u32[144,128]{1,0:T(1,128)}', space=vmem, size = 0x12000, scoped, tag = 'internal scratch']
  #allocation2 [shape = 'f32[2,256]{1,0:T(2,128)}', space=vmem, size = 0x800, scoped, tag = 'scratch operand']
  %s0 = inlined_call_operand.hbm [shape: f32[2,32], index: 0, kind: input, shape index: {}]
  %s1 = inlined_call_operand.hbm [shape: f32[32,256], index: 1, kind: input, shape index: {}]
  %s2 = inlined_call_operand.hbm [shape: f32[3,256], index: 2, kind: input, shape index: {}]
  %s3 = inlined_call_operand.hbm [shape: f32[256,128], index: 3, kind: input, shape index: {}]
  %s4 = inlined_call_operand.vmem [shape: f32[1,128], index: 4, kind: input, shape index: {}]
  %s5 = inlined_call_operand.hbm [shape: f32[2,128], index: 5, kind: output, shape index: {}]
  %s6 = sld [smem:[#allocation0]]
  $region54: #{tpu_custom_call.1} parent=0
    _
  %s8 = ssub.s32 1, %s6
  %s9 = scalar_select 0, %s8, %s6
  $region1: #{tpu_custom_call.1} parent=0
    #allocation3 [shape = 'u8[1024]{0}', space=vmem, size = 0x400, scoped, tag = 'input window, operand 0, single buffered']
    #allocation4 [shape = 's32[1]{0}', space=sflag, size = 0x4, scoped, tag = 'scoped memory for tpu_custom_call.1']
    #allocation5 [shape = 's32[1]{0}', space=sflag, size = 0x4, scoped, tag = 'scoped memory for tpu_custom_call.1']
    #allocation6 [shape = 'u8[32768]{0}', space=vmem, size = 0x8000, scoped, tag = 'input window, operand 1, single buffered']
    #allocation7 [shape = 's32[1]{0}', space=sflag, size = 0x4, scoped, tag = 'scoped memory for tpu_custom_call.1']
    #allocation8 [shape = 'u8[4096]{0}', space=vmem, size = 0x1000, scoped, tag = 'input window, operand 2, single buffered']
    #allocation9 [shape = 'u8[131072]{0}', space=vmem, size = 0x20000, scoped, tag = 'input window, operand 3, single buffered']
    #allocation10 [shape = 's32[1]{0}', space=sflag, size = 0x4, scoped, tag = 'scoped memory for tpu_custom_call.1']
    #allocation11 [shape = 'u8[1024]{0}', space=vmem, size = 0x400, scoped, tag = 'output window, operand 0, single buffered']
    %10 = vsyncpa [#allocation4], 0
    %11 = vsyncpa [#allocation7], 0
    %12 = vsyncpa [#allocation10], 0
    %13 = vsyncpa [#allocation5], 0
    // Predicated region
    $region2: #{tpu_custom_call.1} parent=1 // pred_check
      _
    $region3: #{tpu_custom_call.1} parent=1 // pred_check_branch
      %15 = sbr.rel (0) target = $region5
    $region4: #{tpu_custom_call.1} parent=1 // pred_region
      %s17 = ssub.s32 32, 32
      %18 = vsyncadd [#allocation4], %s17
      %s20 = sshll.u32 [#allocation3], 4
      %s21 = int_to_ptr.vmem [resolvable:$true] %s20
      %23 = dma.hbm_to_vmem [thread:$0]  %s0, 32, %s21, [#allocation4]
    $region5: #{tpu_custom_call.1} parent=1 // pred_fallthru
      _
    // Predicated region
    $region6: #{tpu_custom_call.1} parent=1 // pred_check
      _
    $region7: #{tpu_custom_call.1} parent=1 // pred_check_branch
      %25 = sbr.rel (0) target = $region9
    $region8: #{tpu_custom_call.1} parent=1 // pred_region
      %s27 = ssub.s32 1024, 1024
      %28 = vsyncadd [#allocation7], %s27
      %s29 = sshll.u32 [#allocation6], 4
      %s30 = int_to_ptr.vmem [resolvable:$true] %s29
      %35 = dma.hbm_to_vmem [thread:$0]  %s1, 1024, %s30, [#allocation7], 256, 256, 16
    $region9: #{tpu_custom_call.1} parent=1 // pred_fallthru
      _
    // Predicated region
    $region10: #{tpu_custom_call.1} parent=1 // pred_check
      _
    $region11: #{tpu_custom_call.1} parent=1 // pred_check_branch
      %37 = sbr.rel (0) target = $region13
    $region12: #{tpu_custom_call.1} parent=1 // pred_region
      %s39 = ssub.s32 128, 128
      %40 = vsyncadd [#allocation7], %s39
      %s42 = sshll.u32 [#allocation8], 4
      %s43 = int_to_ptr.vmem [resolvable:$true] %s42
      %45 = dma.hbm_to_vmem [thread:$0]  %s2, 128, %s43, [#allocation7]
    $region13: #{tpu_custom_call.1} parent=1 // pred_fallthru
      _
    // Predicated region
    $region14: #{tpu_custom_call.1} parent=1 // pred_check
      _
    $region15: #{tpu_custom_call.1} parent=1 // pred_check_branch
      %47 = sbr.rel (0) target = $region17
    $region16: #{tpu_custom_call.1} parent=1 // pred_region
      %s49 = ssub.s32 4096, 4096
      %50 = vsyncadd [#allocation10], %s49
      %s51 = sshll.u32 [#allocation9], 4
      %s52 = int_to_ptr.vmem [resolvable:$true] %s51
      %57 = dma.hbm_to_vmem [thread:$0]  %s3, 4096, %s52, [#allocation10], 128, 128, 8
    $region17: #{tpu_custom_call.1} parent=1 // pred_fallthru
      _
    // Predicated region
    $region18: #{tpu_custom_call.1} parent=1 // pred_check
      _
    $region19: #{tpu_custom_call.1} parent=1 // pred_check_branch
      %59 = sbr.rel (0) target = $region21
    $region20: #{tpu_custom_call.1} parent=1 // pred_region
      _
    $region21: #{tpu_custom_call.1} parent=1 // pred_fallthru
      _
    // Predicated region
    $region22: #{tpu_custom_call.1} parent=1 // pred_check
      _
    $region23: #{tpu_custom_call.1} parent=1 // pred_check_branch
      %61 = sbr.rel (0) target = $region25
    $region24: #{tpu_custom_call.1} parent=1 // pred_region
      %62 = dma.done [#allocation4], 32
    $region25: #{tpu_custom_call.1} parent=1 // pred_fallthru
      _
    // Predicated region
    $region26: #{tpu_custom_call.1} parent=1 // pred_check
      _
    $region27: #{tpu_custom_call.1} parent=1 // pred_check_branch
      %64 = sbr.rel (0) target = $region29
    $region28: #{tpu_custom_call.1} parent=1 // pred_region
      %65 = dma.done [#allocation7], 1024
    $region29: #{tpu_custom_call.1} parent=1 // pred_fallthru
      _
    // Predicated region
    $region30: #{tpu_custom_call.1} parent=1 // pred_check
      _
    $region31: #{tpu_custom_call.1} parent=1 // pred_check_branch
      %67 = sbr.rel (0) target = $region33
    $region32: #{tpu_custom_call.1} parent=1 // pred_region
      %68 = dma.done [#allocation7], 128
    $region33: #{tpu_custom_call.1} parent=1 // pred_fallthru
      _
    // Predicated region
    $region34: #{tpu_custom_call.1} parent=1 // pred_check
      _
    $region35: #{tpu_custom_call.1} parent=1 // pred_check_branch
      %70 = sbr.rel (0) target = $region37
    $region36: #{tpu_custom_call.1} parent=1 // pred_region
      %71 = dma.done [#allocation10], 4096
    $region37: #{tpu_custom_call.1} parent=1 // pred_fallthru
      _
    %p72 = scmp.eq.s32.totalorder 0, 0
    // Predicated region
    $region38: #{tpu_custom_call.1} parent=1 // pred_check
      %p73 = pneg %p72
    $region39: #{tpu_custom_call.1} parent=1 // pred_check_branch
      %75 = sbr.rel (%p73) target = $region41
    $region40: #{tpu_custom_call.1} parent=1 // pred_region
      %76 = vst [vmem:[#allocation2] sm:$0xf] 0.0
    $region41: #{tpu_custom_call.1} parent=1 // pred_fallthru
      _
    %v77 = vld [vmem:[#allocation2] sm:$0xf]
    %v78 = vld [vmem:[#allocation3] sm:$0x3]
    %v79 = vld [vmem:[#allocation6] sm:$0xff]
    %v80 = vld [vmem:[#allocation6 + $0x8] sm:$0xff]
    %v81 = vld [vmem:[#allocation6 + $0x10] sm:$0xff]
    %v82 = vld [vmem:[#allocation6 + $0x18] sm:$0xff]
    %v83 = vld [vmem:[#allocation6 + $0x20] sm:$0xff]
    %v84 = vld [vmem:[#allocation6 + $0x28] sm:$0xff]
    %v85 = vld [vmem:[#allocation6 + $0x30] sm:$0xff]
    %v86 = vld [vmem:[#allocation6 + $0x38] sm:$0xff]
    %vm87 = vcmask 261120
    %v89 = vsel %vm87, %v78, 0
    %91 = vmatprep.subr.mxu0 0.0
    %92 = vmatpush1.msra.mxu0 0.0
    %93 = vmatprep.subr.mxu0 0.0
    %94 = vmatpush1.msra.mxu0 0.0
    %95 = vmatprep.subr.mxu0 0.0
    %96 = vmatpush1.msra.mxu0 0.0
    %97 = vmatprep.subr.mxu0 0.0
    %98 = vmatpush1.msra.mxu0 0.0
    %99 = vmatprep.subr.mxu0 0.0
    %100 = vmatpush1.msra.mxu0 0.0
    %101 = vmatprep.subr.mxu0 0.0
    %102 = vmatpush1.msra.mxu0 0.0
    %103 = vmatprep.subr.mxu0 0.0
    %104 = vmatpush1.msra.mxu0 0.0
    %105 = vmatprep.subr.mxu0 0.0
    %106 = vmatpush1.msra.mxu0 0.0
    %107 = vmatprep.subr.mxu0 0.0
    %108 = vmatpush1.msra.mxu0 0.0
    %109 = vmatprep.subr.mxu0 0.0
    %110 = vmatpush1.msra.mxu0 0.0
    %111 = vmatprep.subr.mxu0 0.0
    %112 = vmatpush1.msra.mxu0 0.0
    %113 = vmatprep.subr.mxu0 0.0
    %114 = vmatpush1.msra.mxu0 0.0
    %115 = vmatprep.subr.mxu0 %v86
    %116 = vmatpush1.msra.mxu0 %v85
    %117 = vmatprep.subr.mxu0 %v84
    %118 = vmatpush1.msra.mxu0 %v83
    %119 = vmatprep.subr.mxu0 %v82
    %120 = vmatpush1.msra.mxu0 %v81
    %121 = vmatprep.subr.mxu0 %v80
    %122 = vmatpush1.msra.mxu0 %v79
    %123 = vmatprep.subr.mxu0 0.0
    %124 = vmatpush2.msra.mxu0 0.0
    %125 = vmatprep.subr.mxu0 0.0
    %126 = vmatpush2.msra.mxu0 0.0
    %127 = vmatprep.subr.mxu0 0.0
    %128 = vmatpush2.msra.mxu0 0.0
    %129 = vmatprep.subr.mxu0 0.0
    %130 = vmatpush2.msra.mxu0 0.0
    %131 = vmatprep.subr.mxu0 0.0
    %132 = vmatpush2.msra.mxu0 0.0
    %133 = vmatprep.subr.mxu0 0.0
    %134 = vmatpush2.msra.mxu0 0.0
    %135 = vmatprep.subr.mxu0 0.0
    %136 = vmatpush2.msra.mxu0 0.0
    %137 = vmatprep.subr.mxu0 0.0
    %138 = vmatpush2.msra.mxu0 0.0
    %139 = vmatprep.subr.mxu0 0.0
    %140 = vmatpush2.msra.mxu0 0.0
    %141 = vmatprep.subr.mxu0 0.0
    %142 = vmatpush2.msra.mxu0 0.0
    %143 = vmatprep.subr.mxu0 0.0
    %144 = vmatpush2.msra.mxu0 0.0
    %145 = vmatprep.subr.mxu0 0.0
    %146 = vmatpush2.msra.mxu0 0.0
    %147 = vmatprep.subr.mxu0 0.0
    %148 = vmatpush2.msra.mxu0 0.0
    %149 = vmatprep.subr.mxu0 0.0
    %150 = vmatpush2.msra.mxu0 0.0
    %151 = vmatprep.subr.mxu0 0.0
    %152 = vmatpush2.msra.mxu0 0.0
    %153 = vmatprep.subr.mxu0 0.0
    %154 = vmatpush2.msra.mxu0 0.0
    %155 = vmatprep.mubr.f32.mxu0 0.0
    %156 = vmatmul.mubr.f32.gmra.mxu0 %v89
    %v157 = vpop.f32.mrf.mxu0
    %v158 = vadd.f32 0.0, %v157
    %v159 = vpop.f32.mrf.mxu0
    %v160 = vadd.f32 0.0, %v159
    %161 = vdwg.mxu0
    %v164 = vcombine.low %v158, %v160
    %v166 = vunpack.c.l.s4 1983009808
    %v167 = vunpack.c.0.s8 %v166
    %v168 = vlaneseq
    %v169 = vshrl.u32 %v168, 7
    %v170 = vsub.s32 %v167, %v169
    %v171 = vrot.slane %v164, %v170
    %v173 = vadd.f32 %v77, %v171
    %174 = vst [vmem:[#allocation2] sm:$0xf] %v173
    // Predicated region
    $region42: #{tpu_custom_call.1} parent=1 // pred_check
      %p175 = pneg %p72
    $region43: #{tpu_custom_call.1} parent=1 // pred_check_branch
      %177 = sbr.rel (%p175) target = $region45
    $region44: #{tpu_custom_call.1} parent=1 // pred_region
      %v178 = vld [vmem:[#allocation8] ss:$4 sm:$0x3]
      %s179 = scalar_lea.vmem [#allocation8], 1
      %v180 = vld [vmem:[%s179] ss:$4 sm:$0x3]
      %s181 = scalar_lea.vmem [#allocation8], 2
      %v182 = vld [vmem:[%s181] ss:$4 sm:$0x3]
      %v183 = vld [vmem:[#allocation2] sm:$0xf]
      %v185 = vlaneseq
      %v186 = vshrl.u32 %v185, 7
      %v187 = vsub.s32 0, %v186
      %v188 = vrot.slane %v178, %v187
      %v189 = vlaneseq
      %v190 = vshrl.u32 %v189, 7
      %v191 = vsub.s32 1, %v190
      %v192 = vrot.slane %v178, %v191
      %v193 = vcombine.low %v188, %v192
      %v195 = vunpack.c.l.s4 1983009808
      %v196 = vunpack.c.0.s8 %v195
      %v197 = vlaneseq
      %v198 = vshrl.u32 %v197, 7
      %v199 = vsub.s32 %v196, %v198
      %v200 = vrot.slane %v193, %v199
      %v202 = vadd.f32 %v183, %v200
      %v205 = vunpack.c.l.s4 1983009808
      %v206 = vunpack.c.0.s8 %v205
      %v207 = vlaneseq
      %v208 = vshrl.u32 %v207, 7
      %v209 = vsub.s32 %v206, %v208
      %v210 = vrot.slane %v202, %v209
      %v211 = vcombine.high %v210, %v210
      %vm214 = vcmask 1041408
      %v215 = vsel %vm214, %v210, 0.0
      %v216 = vsel %vm214, %v211, 0.0
      %v217 = vadd.f32 %v215, %v216
      %218 = vadd.xlane.f32.xlu0 %v217
      %v219 = vpop.xlane.xlu0 %218
      %v220 = vrcp.pop 256.0
      %v221 = vmul.f32 %v219, %v220
      %v222 = vmul.f32 %v202, %v202
      %v225 = vunpack.c.l.s4 1983009808
      %v226 = vunpack.c.0.s8 %v225
      %v227 = vlaneseq
      %v228 = vshrl.u32 %v227, 7
      %v229 = vsub.s32 %v226, %v228
      %v230 = vrot.slane %v222, %v229
      %v231 = vcombine.high %v230, %v230
      %v234 = vsel %vm214, %v230, 0.0
      %v235 = vsel %vm214, %v231, 0.0
      %v236 = vadd.f32 %v234, %v235
      %237 = vadd.xlane.f32.xlu0 %v236
      %v238 = vpop.xlane.xlu0 %237
      %v239 = vmul.f32 %v238, %v220
      %v240 = vmul.f32 %v221, %v221
      %v241 = vsub.f32 %v239, %v240
      %v242 = vmax.f32 %v241, 0.0
      %v245 = vunpack.c.l.s4 269488144
      %v246 = vunpack.c.0.s8 %v245
      %v247 = vlaneseq
      %v248 = vshrl.u32 %v247, 7
      %v249 = vsub.s32 %v246, %v248
      %v250 = vrot.slane %v221, %v249
      %v252 = vsub.f32 %v202, %v250
      %v253 = vadd.f32 %v242, 1e-05
      %v254 = vrsqrt.pop %v253
      %v257 = vunpack.c.l.s4 269488144
      %v258 = vunpack.c.0.s8 %v257
      %v259 = vlaneseq
      %v260 = vshrl.u32 %v259, 7
      %v261 = vsub.s32 %v258, %v260
      %v262 = vrot.slane %v254, %v261
      %v264 = vmul.f32 %v252, %v262
      %v266 = vlaneseq
      %v267 = vshrl.u32 %v266, 7
      %v268 = vsub.s32 0, %v267
      %v269 = vrot.slane %v180, %v268
      %v270 = vlaneseq
      %v271 = vshrl.u32 %v270, 7
      %v272 = vsub.s32 1, %v271
      %v273 = vrot.slane %v180, %v272
      %v274 = vcombine.low %v269, %v273
      %v276 = vunpack.c.l.s4 1983009808
      %v277 = vunpack.c.0.s8 %v276
      %v278 = vlaneseq
      %v279 = vshrl.u32 %v278, 7
      %v280 = vsub.s32 %v277, %v279
      %v281 = vrot.slane %v274, %v280
      %v283 = vmul.f32 %v264, %v281
      %v285 = vlaneseq
      %v286 = vshrl.u32 %v285, 7
      %v287 = vsub.s32 0, %v286
      %v288 = vrot.slane %v182, %v287
      %v289 = vlaneseq
      %v290 = vshrl.u32 %v289, 7
      %v291 = vsub.s32 1, %v290
      %v292 = vrot.slane %v182, %v291
      %v293 = vcombine.low %v288, %v292
      %v295 = vunpack.c.l.s4 1983009808
      %v296 = vunpack.c.0.s8 %v295
      %v297 = vlaneseq
      %v298 = vshrl.u32 %v297, 7
      %v299 = vsub.s32 %v296, %v298
      %v300 = vrot.slane %v293, %v299
      %v302 = vadd.f32 %v283, %v300
      %v303 = vmax.f32 %v302, 0.0
      %v304 = vld [vmem:[#allocation9] sm:$0xff]
      %v305 = vld [vmem:[#allocation9 + $0x8] sm:$0xff]
      %v306 = vld [vmem:[#allocation9 + $0x10] sm:$0xff]
      %v307 = vld [vmem:[#allocation9 + $0x18] sm:$0xff]
      %v308 = vld [vmem:[#allocation9 + $0x20] sm:$0xff]
      %v309 = vld [vmem:[#allocation9 + $0x28] sm:$0xff]
      %v310 = vld [vmem:[#allocation9 + $0x30] sm:$0xff]
      %v311 = vld [vmem:[#allocation9 + $0x38] sm:$0xff]
      %v312 = vld [vmem:[#allocation9 + $0x40] sm:$0xff]
      %v313 = vld [vmem:[#allocation9 + $0x48] sm:$0xff]
      %v314 = vld [vmem:[#allocation9 + $0x50] sm:$0xff]
      %v315 = vld [vmem:[#allocation9 + $0x58] sm:$0xff]
      %v316 = vld [vmem:[#allocation9 + $0x60] sm:$0xff]
      %v317 = vld [vmem:[#allocation9 + $0x68] sm:$0xff]
      %v318 = vld [vmem:[#allocation9 + $0x70] sm:$0xff]
      %v319 = vld [vmem:[#allocation9 + $0x78] sm:$0xff]
      %v320 = vld [vmem:[#allocation9 + $0x80] sm:$0xff]
      %v321 = vld [vmem:[#allocation9 + $0x88] sm:$0xff]
      %v322 = vld [vmem:[#allocation9 + $0x90] sm:$0xff]
      %v323 = vld [vmem:[#allocation9 + $0x98] sm:$0xff]
      %v324 = vld [vmem:[#allocation9 + $0xa0] sm:$0xff]
      %v325 = vld [vmem:[#allocation9 + $0xa8] sm:$0xff]
      %v326 = vld [vmem:[#allocation9 + $0xb0] sm:$0xff]
      %v327 = vld [vmem:[#allocation9 + $0xb8] sm:$0xff]
      %v328 = vld [vmem:[#allocation9 + $0xc0] sm:$0xff]
      %v329 = vld [vmem:[#allocation9 + $0xc8] sm:$0xff]
      %v330 = vld [vmem:[#allocation9 + $0xd0] sm:$0xff]
      %v331 = vld [vmem:[#allocation9 + $0xd8] sm:$0xff]
      %v332 = vld [vmem:[#allocation9 + $0xe0] sm:$0xff]
      %v333 = vld [vmem:[#allocation9 + $0xe8] sm:$0xff]
      %v334 = vld [vmem:[#allocation9 + $0xf0] sm:$0xff]
      %v335 = vld [vmem:[#allocation9 + $0xf8] sm:$0xff]
      %v336 = vld [vmem:[%s4] sm:$0x1]
      %v338 = vlaneseq
      %v339 = vshrl.u32 %v338, 7
      %v340 = vsub.s32 0, %v339
      %v341 = vrot.slane %v336, %v340
      %v345 = vunpack.c.l.s4 1983009808
      %v346 = vunpack.c.0.s8 %v345
      %v347 = vlaneseq
      %v348 = vshrl.u32 %v347, 7
      %v349 = vsub.s32 %v346, %v348
      %v350 = vrot.slane %v303, %v349
      %v351 = vcombine.high %v350, %v350
      %354 = vmatprep.subr.mxu0 0.0
      %355 = vmatpush1.msra.mxu0 %v319
      %356 = vmatprep.subr.mxu0 0.0
      %357 = vmatpush1.msra.mxu0 %v318
      %358 = vmatprep.subr.mxu0 0.0
      %359 = vmatpush1.msra.mxu0 %v317
      %360 = vmatprep.subr.mxu0 0.0
      %361 = vmatpush1.msra.mxu0 %v316
      %362 = vmatprep.subr.mxu0 0.0
      %363 = vmatpush1.msra.mxu0 %v315
      %364 = vmatprep.subr.mxu0 0.0
      %365 = vmatpush1.msra.mxu0 %v314
      %366 = vmatprep.subr.mxu0 0.0
      %367 = vmatpush1.msra.mxu0 %v313
      %368 = vmatprep.subr.mxu0 0.0
      %369 = vmatpush1.msra.mxu0 %v312
      %370 = vmatprep.subr.mxu0 0.0
      %371 = vmatpush1.msra.mxu0 %v311
      %372 = vmatprep.subr.mxu0 0.0
      %373 = vmatpush1.msra.mxu0 %v310
      %374 = vmatprep.subr.mxu0 0.0
      %375 = vmatpush1.msra.mxu0 %v309
      %376 = vmatprep.subr.mxu0 0.0
      %377 = vmatpush1.msra.mxu0 %v308
      %378 = vmatprep.subr.mxu0 0.0
      %379 = vmatpush1.msra.mxu0 %v307
      %380 = vmatprep.subr.mxu0 0.0
      %381 = vmatpush1.msra.mxu0 %v306
      %382 = vmatprep.subr.mxu0 0.0
      %383 = vmatpush1.msra.mxu0 %v305
      %384 = vmatprep.subr.mxu0 0.0
      %385 = vmatpush1.msra.mxu0 %v304
      %386 = vmatprep.subr.mxu0 0.0
      %387 = vmatpush2.msra.mxu0 %v335
      %388 = vmatprep.subr.mxu0 0.0
      %389 = vmatpush2.msra.mxu0 %v334
      %390 = vmatprep.subr.mxu0 0.0
      %391 = vmatpush2.msra.mxu0 %v333
      %392 = vmatprep.subr.mxu0 0.0
      %393 = vmatpush2.msra.mxu0 %v332
      %394 = vmatprep.subr.mxu0 0.0
      %395 = vmatpush2.msra.mxu0 %v331
      %396 = vmatprep.subr.mxu0 0.0
      %397 = vmatpush2.msra.mxu0 %v330
      %398 = vmatprep.subr.mxu0 0.0
      %399 = vmatpush2.msra.mxu0 %v329
      %400 = vmatprep.subr.mxu0 0.0
      %401 = vmatpush2.msra.mxu0 %v328
      %402 = vmatprep.subr.mxu0 0.0
      %403 = vmatpush2.msra.mxu0 %v327
      %404 = vmatprep.subr.mxu0 0.0
      %405 = vmatpush2.msra.mxu0 %v326
      %406 = vmatprep.subr.mxu0 0.0
      %407 = vmatpush2.msra.mxu0 %v325
      %408 = vmatprep.subr.mxu0 0.0
      %409 = vmatpush2.msra.mxu0 %v324
      %410 = vmatprep.subr.mxu0 0.0
      %411 = vmatpush2.msra.mxu0 %v323
      %412 = vmatprep.subr.mxu0 0.0
      %413 = vmatpush2.msra.mxu0 %v322
      %414 = vmatprep.subr.mxu0 0.0
      %415 = vmatpush2.msra.mxu0 %v321
      %416 = vmatprep.subr.mxu0 0.0
      %417 = vmatpush2.msra.mxu0 %v320
      %418 = vmatprep.mubr.f32.mxu0 %v351
      %419 = vmatmul.mubr.f32.gmra.mxu0 %v350
      %v420 = vpop.f32.mrf.mxu0
      %v421 = vadd.f32 %v341, %v420
      %v422 = vpop.f32.mrf.mxu0
      %423 = vdwg.mxu0
      %424 = vst [vmem:[#allocation11] sm:$0x3] %v421
    $region45: #{tpu_custom_call.1} parent=1 // pred_fallthru
      _
    // Predicated region
    $region46: #{tpu_custom_call.1} parent=1 // pred_check
      _
    $region47: #{tpu_custom_call.1} parent=1 // pred_check_branch
      %426 = sbr.rel (0) target = $region49
    $region48: #{tpu_custom_call.1} parent=1 // pred_region
      %s428 = ssub.s32 32, 32
      %429 = vsyncadd [#allocation5], %s428
      %s431 = sshll.u32 [#allocation11], 4
      %s432 = int_to_ptr.vmem [resolvable:$true] %s431
      %434 = dma.vmem_to_hbm [thread:$0]  %s432, 32, %s5, [#allocation5]
    $region49: #{tpu_custom_call.1} parent=1 // pred_fallthru
      _
    // Predicated region
    $region50: #{tpu_custom_call.1} parent=1 // pred_check
      _
    $region51: #{tpu_custom_call.1} parent=1 // pred_check_branch
      %436 = sbr.rel (0) target = $region53
    $region52: #{tpu_custom_call.1} parent=1 // pred_region
      %437 = dma.done [#allocation5], 32
    $region53: #{tpu_custom_call.1} parent=1 // pred_fallthru
      _
    %438 = vsyncpa [#allocation4], 1
    %439 = vsyncpa [#allocation7], 1
    %440 = vsyncpa [#allocation10], 1
    %441 = vsyncpa [#allocation5], 1

// kernel: tpu_custom_call.1
$region0: #{tpu_custom_call.1}
  #allocation0 [shape = 'u32[]', space=smem, size = 0x4, offset = 0x4, fixed_abs, tag = 'smem constant byte address 0x4 - core index']
  #allocation1 [shape = 'u32[144,128]{1,0:T(1,128)}', space=vmem, size = 0x12000, scoped, tag = 'internal scratch']
  #allocation2 [shape = 'f32[2,256]{1,0:T(2,128)}', space=vmem, size = 0x800, scoped, tag = 'scratch operand']
  %s0 = inlined_call_operand.hbm [shape: f32[2,32], index: 0, kind: input, shape index: {}]
  %s1 = inlined_call_operand.hbm [shape: f32[32,256], index: 1, kind: input, shape index: {}]
  %s2 = inlined_call_operand.hbm [shape: f32[3,256], index: 2, kind: input, shape index: {}]
  %s3 = inlined_call_operand.hbm [shape: f32[256,128], index: 3, kind: input, shape index: {}]
  %s4 = inlined_call_operand.vmem [shape: f32[1,128], index: 4, kind: input, shape index: {}]
  %s5 = inlined_call_operand.hbm [shape: f32[2,128], index: 5, kind: output, shape index: {}]
  %s6 = sld [smem:[#allocation0]]
  $region54: #{tpu_custom_call.1} parent=0
    _
  %s8 = ssub.s32 1, %s6
  %s9 = scalar_select 0, %s8, %s6
  $region1: #{tpu_custom_call.1} parent=0
    #allocation3 [shape = 'u8[1024]{0}', space=vmem, size = 0x400, scoped, tag = 'input window, operand 0, single buffered']
    #allocation4 [shape = 's32[1]{0}', space=sflag, size = 0x4, scoped, tag = 'scoped memory for tpu_custom_call.1']
    #allocation5 [shape = 's32[1]{0}', space=sflag, size = 0x4, scoped, tag = 'scoped memory for tpu_custom_call.1']
    #allocation6 [shape = 'u8[32768]{0}', space=vmem, size = 0x8000, scoped, tag = 'input window, operand 1, single buffered']
    #allocation7 [shape = 's32[1]{0}', space=sflag, size = 0x4, scoped, tag = 'scoped memory for tpu_custom_call.1']
    #allocation8 [shape = 'u8[4096]{0}', space=vmem, size = 0x1000, scoped, tag = 'input window, operand 2, single buffered']
    #allocation9 [shape = 'u8[131072]{0}', space=vmem, size = 0x20000, scoped, tag = 'input window, operand 3, single buffered']
    #allocation10 [shape = 's32[1]{0}', space=sflag, size = 0x4, scoped, tag = 'scoped memory for tpu_custom_call.1']
    #allocation11 [shape = 'u8[1024]{0}', space=vmem, size = 0x400, scoped, tag = 'output window, operand 0, single buffered']
    %10 = vsyncpa [#allocation4], 0
    %11 = vsyncpa [#allocation7], 0
    %12 = vsyncpa [#allocation10], 0
    %13 = vsyncpa [#allocation5], 0
    // Predicated region
    $region2: #{tpu_custom_call.1} parent=1 // pred_check
      _
    $region3: #{tpu_custom_call.1} parent=1 // pred_check_branch
      %15 = sbr.rel (0) target = $region5
    $region4: #{tpu_custom_call.1} parent=1 // pred_region
      %s17 = ssub.s32 32, 32
      %18 = vsyncadd [#allocation4], %s17
      %s20 = sshll.u32 [#allocation3], 4
      %s21 = int_to_ptr.vmem [resolvable:$true] %s20
      %23 = dma.hbm_to_vmem [thread:$0]  %s0, 32, %s21, [#allocation4]
    $region5: #{tpu_custom_call.1} parent=1 // pred_fallthru
      _
    // Predicated region
    $region6: #{tpu_custom_call.1} parent=1 // pred_check
      _
    $region7: #{tpu_custom_call.1} parent=1 // pred_check_branch
      %25 = sbr.rel (0) target = $region9
    $region8: #{tpu_custom_call.1} parent=1 // pred_region
      %s27 = ssub.s32 1024, 1024
      %28 = vsyncadd [#allocation7], %s27
      %s29 = sshll.u32 [#allocation6], 4
      %s30 = int_to_ptr.vmem [resolvable:$true] %s29
      %35 = dma.hbm_to_vmem [thread:$0]  %s1, 1024, %s30, [#allocation7], 256, 256, 16
    $region9: #{tpu_custom_call.1} parent=1 // pred_fallthru
      _
    // Predicated region
    $region10: #{tpu_custom_call.1} parent=1 // pred_check
      _
    $region11: #{tpu_custom_call.1} parent=1 // pred_check_branch
      %37 = sbr.rel (0) target = $region13
    $region12: #{tpu_custom_call.1} parent=1 // pred_region
      %s39 = ssub.s32 128, 128
      %40 = vsyncadd [#allocation7], %s39
      %s42 = sshll.u32 [#allocation8], 4
      %s43 = int_to_ptr.vmem [resolvable:$true] %s42
      %45 = dma.hbm_to_vmem [thread:$0]  %s2, 128, %s43, [#allocation7]
    $region13: #{tpu_custom_call.1} parent=1 // pred_fallthru
      _
    // Predicated region
    $region14: #{tpu_custom_call.1} parent=1 // pred_check
      _
    $region15: #{tpu_custom_call.1} parent=1 // pred_check_branch
      %47 = sbr.rel (0) target = $region17
    $region16: #{tpu_custom_call.1} parent=1 // pred_region
      %s49 = ssub.s32 4096, 4096
      %50 = vsyncadd [#allocation10], %s49
      %s51 = sshll.u32 [#allocation9], 4
      %s52 = int_to_ptr.vmem [resolvable:$true] %s51
      %57 = dma.hbm_to_vmem [thread:$0]  %s3, 4096, %s52, [#allocation10], 128, 128, 8
    $region17: #{tpu_custom_call.1} parent=1 // pred_fallthru
      _
    // Predicated region
    $region18: #{tpu_custom_call.1} parent=1 // pred_check
      _
    $region19: #{tpu_custom_call.1} parent=1 // pred_check_branch
      %59 = sbr.rel (0) target = $region21
    $region20: #{tpu_custom_call.1} parent=1 // pred_region
      _
    $region21: #{tpu_custom_call.1} parent=1 // pred_fallthru
      _
    // Predicated region
    $region22: #{tpu_custom_call.1} parent=1 // pred_check
      _
    $region23: #{tpu_custom_call.1} parent=1 // pred_check_branch
      %61 = sbr.rel (0) target = $region25
    $region24: #{tpu_custom_call.1} parent=1 // pred_region
      %62 = dma.done [#allocation4], 32
    $region25: #{tpu_custom_call.1} parent=1 // pred_fallthru
      _
    // Predicated region
    $region26: #{tpu_custom_call.1} parent=1 // pred_check
      _
    $region27: #{tpu_custom_call.1} parent=1 // pred_check_branch
      %64 = sbr.rel (0) target = $region29
    $region28: #{tpu_custom_call.1} parent=1 // pred_region
      %65 = dma.done [#allocation7], 1024
    $region29: #{tpu_custom_call.1} parent=1 // pred_fallthru
      _
    // Predicated region
    $region30: #{tpu_custom_call.1} parent=1 // pred_check
      _
    $region31: #{tpu_custom_call.1} parent=1 // pred_check_branch
      %67 = sbr.rel (0) target = $region33
    $region32: #{tpu_custom_call.1} parent=1 // pred_region
      %68 = dma.done [#allocation7], 128
    $region33: #{tpu_custom_call.1} parent=1 // pred_fallthru
      _
    // Predicated region
    $region34: #{tpu_custom_call.1} parent=1 // pred_check
      _
    $region35: #{tpu_custom_call.1} parent=1 // pred_check_branch
      %70 = sbr.rel (0) target = $region37
    $region36: #{tpu_custom_call.1} parent=1 // pred_region
      %71 = dma.done [#allocation10], 4096
    $region37: #{tpu_custom_call.1} parent=1 // pred_fallthru
      _
    %p72 = scmp.eq.s32.totalorder 0, 0
    // Predicated region
    $region38: #{tpu_custom_call.1} parent=1 // pred_check
      %p73 = pneg %p72
    $region39: #{tpu_custom_call.1} parent=1 // pred_check_branch
      %75 = sbr.rel (%p73) target = $region41
    $region40: #{tpu_custom_call.1} parent=1 // pred_region
      %76 = vst [vmem:[#allocation2] sm:$0xf] 0.0
    $region41: #{tpu_custom_call.1} parent=1 // pred_fallthru
      _
    %v77 = vld [vmem:[#allocation2] sm:$0xf]
    %v78 = vld [vmem:[#allocation3] sm:$0x3]
    %v79 = vld [vmem:[#allocation6] sm:$0xff]
    %v80 = vld [vmem:[#allocation6 + $0x8] sm:$0xff]
    %v81 = vld [vmem:[#allocation6 + $0x10] sm:$0xff]
    %v82 = vld [vmem:[#allocation6 + $0x18] sm:$0xff]
    %v83 = vld [vmem:[#allocation6 + $0x20] sm:$0xff]
    %v84 = vld [vmem:[#allocation6 + $0x28] sm:$0xff]
    %v85 = vld [vmem:[#allocation6 + $0x30] sm:$0xff]
    %v86 = vld [vmem:[#allocation6 + $0x38] sm:$0xff]
    %vm87 = vcmask 261120
    %v89 = vsel %vm87, %v78, 0
    %91 = vmatprep.subr.mxu0 0.0
    %92 = vmatpush1.msra.mxu0 0.0
    %93 = vmatprep.subr.mxu0 0.0
    %94 = vmatpush1.msra.mxu0 0.0
    %95 = vmatprep.subr.mxu0 0.0
    %96 = vmatpush1.msra.mxu0 0.0
    %97 = vmatprep.subr.mxu0 0.0
    %98 = vmatpush1.msra.mxu0 0.0
    %99 = vmatprep.subr.mxu0 0.0
    %100 = vmatpush1.msra.mxu0 0.0
    %101 = vmatprep.subr.mxu0 0.0
    %102 = vmatpush1.msra.mxu0 0.0
    %103 = vmatprep.subr.mxu0 0.0
    %104 = vmatpush1.msra.mxu0 0.0
    %105 = vmatprep.subr.mxu0 0.0
    %106 = vmatpush1.msra.mxu0 0.0
    %107 = vmatprep.subr.mxu0 0.0
    %108 = vmatpush1.msra.mxu0 0.0
    %109 = vmatprep.subr.mxu0 0.0
    %110 = vmatpush1.msra.mxu0 0.0
    %111 = vmatprep.subr.mxu0 0.0
    %112 = vmatpush1.msra.mxu0 0.0
    %113 = vmatprep.subr.mxu0 0.0
    %114 = vmatpush1.msra.mxu0 0.0
    %115 = vmatprep.subr.mxu0 %v86
    %116 = vmatpush1.msra.mxu0 %v85
    %117 = vmatprep.subr.mxu0 %v84
    %118 = vmatpush1.msra.mxu0 %v83
    %119 = vmatprep.subr.mxu0 %v82
    %120 = vmatpush1.msra.mxu0 %v81
    %121 = vmatprep.subr.mxu0 %v80
    %122 = vmatpush1.msra.mxu0 %v79
    %123 = vmatprep.subr.mxu0 0.0
    %124 = vmatpush2.msra.mxu0 0.0
    %125 = vmatprep.subr.mxu0 0.0
    %126 = vmatpush2.msra.mxu0 0.0
    %127 = vmatprep.subr.mxu0 0.0
    %128 = vmatpush2.msra.mxu0 0.0
    %129 = vmatprep.subr.mxu0 0.0
    %130 = vmatpush2.msra.mxu0 0.0
    %131 = vmatprep.subr.mxu0 0.0
    %132 = vmatpush2.msra.mxu0 0.0
    %133 = vmatprep.subr.mxu0 0.0
    %134 = vmatpush2.msra.mxu0 0.0
    %135 = vmatprep.subr.mxu0 0.0
    %136 = vmatpush2.msra.mxu0 0.0
    %137 = vmatprep.subr.mxu0 0.0
    %138 = vmatpush2.msra.mxu0 0.0
    %139 = vmatprep.subr.mxu0 0.0
    %140 = vmatpush2.msra.mxu0 0.0
    %141 = vmatprep.subr.mxu0 0.0
    %142 = vmatpush2.msra.mxu0 0.0
    %143 = vmatprep.subr.mxu0 0.0
    %144 = vmatpush2.msra.mxu0 0.0
    %145 = vmatprep.subr.mxu0 0.0
    %146 = vmatpush2.msra.mxu0 0.0
    %147 = vmatprep.subr.mxu0 0.0
    %148 = vmatpush2.msra.mxu0 0.0
    %149 = vmatprep.subr.mxu0 0.0
    %150 = vmatpush2.msra.mxu0 0.0
    %151 = vmatprep.subr.mxu0 0.0
    %152 = vmatpush2.msra.mxu0 0.0
    %153 = vmatprep.subr.mxu0 0.0
    %154 = vmatpush2.msra.mxu0 0.0
    %155 = vmatprep.mubr.f32.mxu0 0.0
    %156 = vmatmul.mubr.f32.gmra.mxu0 %v89
    %v157 = vpop.f32.mrf.mxu0
    %v158 = vadd.f32 0.0, %v157
    %v159 = vpop.f32.mrf.mxu0
    %v160 = vadd.f32 0.0, %v159
    %161 = vdwg.mxu0
    %v164 = vcombine.low %v158, %v160
    %v166 = vunpack.c.l.s4 1983009808
    %v167 = vunpack.c.0.s8 %v166
    %v168 = vlaneseq
    %v169 = vshrl.u32 %v168, 7
    %v170 = vsub.s32 %v167, %v169
    %v171 = vrot.slane %v164, %v170
    %v173 = vadd.f32 %v77, %v171
    %174 = vst [vmem:[#allocation2] sm:$0xf] %v173
    // Predicated region
    $region42: #{tpu_custom_call.1} parent=1 // pred_check
      %p175 = pneg %p72
    $region43: #{tpu_custom_call.1} parent=1 // pred_check_branch
      %177 = sbr.rel (%p175) target = $region45
    $region44: #{tpu_custom_call.1} parent=1 // pred_region
      %v178 = vld [vmem:[#allocation8] ss:$4 sm:$0x3]
      %s179 = scalar_lea.vmem [#allocation8], 1
      %v180 = vld [vmem:[%s179] ss:$4 sm:$0x3]
      %s181 = scalar_lea.vmem [#allocation8], 2
      %v182 = vld [vmem:[%s181] ss:$4 sm:$0x3]
      %v183 = vld [vmem:[#allocation2] sm:$0xf]
      %v185 = vlaneseq
      %v186 = vshrl.u32 %v185, 7
      %v187 = vsub.s32 0, %v186
      %v188 = vrot.slane %v178, %v187
      %v189 = vlaneseq
      %v190 = vshrl.u32 %v189, 7
      %v191 = vsub.s32 1, %v190
      %v192 = vrot.slane %v178, %v191
      %v193 = vcombine.low %v188, %v192
      %v195 = vunpack.c.l.s4 1983009808
      %v196 = vunpack.c.0.s8 %v195
      %v197 = vlaneseq
      %v198 = vshrl.u32 %v197, 7
      %v199 = vsub.s32 %v196, %v198
      %v200 = vrot.slane %v193, %v199
      %v202 = vadd.f32 %v183, %v200
      %v205 = vunpack.c.l.s4 1983009808
      %v206 = vunpack.c.0.s8 %v205
      %v207 = vlaneseq
      %v208 = vshrl.u32 %v207, 7
      %v209 = vsub.s32 %v206, %v208
      %v210 = vrot.slane %v202, %v209
      %v211 = vcombine.high %v210, %v210
      %vm214 = vcmask 1041408
      %v215 = vsel %vm214, %v210, 0.0
      %v216 = vsel %vm214, %v211, 0.0
      %v217 = vadd.f32 %v215, %v216
      %218 = vadd.xlane.f32.xlu0 %v217
      %v219 = vpop.xlane.xlu0 %218
      %v220 = vrcp.pop 256.0
      %v221 = vmul.f32 %v219, %v220
      %v222 = vmul.f32 %v202, %v202
      %v225 = vunpack.c.l.s4 1983009808
      %v226 = vunpack.c.0.s8 %v225
      %v227 = vlaneseq
      %v228 = vshrl.u32 %v227, 7
      %v229 = vsub.s32 %v226, %v228
      %v230 = vrot.slane %v222, %v229
      %v231 = vcombine.high %v230, %v230
      %v234 = vsel %vm214, %v230, 0.0
      %v235 = vsel %vm214, %v231, 0.0
      %v236 = vadd.f32 %v234, %v235
      %237 = vadd.xlane.f32.xlu0 %v236
      %v238 = vpop.xlane.xlu0 %237
      %v239 = vmul.f32 %v238, %v220
      %v240 = vmul.f32 %v221, %v221
      %v241 = vsub.f32 %v239, %v240
      %v242 = vmax.f32 %v241, 0.0
      %v245 = vunpack.c.l.s4 269488144
      %v246 = vunpack.c.0.s8 %v245
      %v247 = vlaneseq
      %v248 = vshrl.u32 %v247, 7
      %v249 = vsub.s32 %v246, %v248
      %v250 = vrot.slane %v221, %v249
      %v252 = vsub.f32 %v202, %v250
      %v253 = vadd.f32 %v242, 1e-05
      %v254 = vrsqrt.pop %v253
      %v257 = vunpack.c.l.s4 269488144
      %v258 = vunpack.c.0.s8 %v257
      %v259 = vlaneseq
      %v260 = vshrl.u32 %v259, 7
      %v261 = vsub.s32 %v258, %v260
      %v262 = vrot.slane %v254, %v261
      %v264 = vmul.f32 %v252, %v262
      %v266 = vlaneseq
      %v267 = vshrl.u32 %v266, 7
      %v268 = vsub.s32 0, %v267
      %v269 = vrot.slane %v180, %v268
      %v270 = vlaneseq
      %v271 = vshrl.u32 %v270, 7
      %v272 = vsub.s32 1, %v271
      %v273 = vrot.slane %v180, %v272
      %v274 = vcombine.low %v269, %v273
      %v276 = vunpack.c.l.s4 1983009808
      %v277 = vunpack.c.0.s8 %v276
      %v278 = vlaneseq
      %v279 = vshrl.u32 %v278, 7
      %v280 = vsub.s32 %v277, %v279
      %v281 = vrot.slane %v274, %v280
      %v283 = vmul.f32 %v264, %v281
      %v285 = vlaneseq
      %v286 = vshrl.u32 %v285, 7
      %v287 = vsub.s32 0, %v286
      %v288 = vrot.slane %v182, %v287
      %v289 = vlaneseq
      %v290 = vshrl.u32 %v289, 7
      %v291 = vsub.s32 1, %v290
      %v292 = vrot.slane %v182, %v291
      %v293 = vcombine.low %v288, %v292
      %v295 = vunpack.c.l.s4 1983009808
      %v296 = vunpack.c.0.s8 %v295
      %v297 = vlaneseq
      %v298 = vshrl.u32 %v297, 7
      %v299 = vsub.s32 %v296, %v298
      %v300 = vrot.slane %v293, %v299
      %v302 = vadd.f32 %v283, %v300
      %v303 = vmax.f32 %v302, 0.0
      %v304 = vld [vmem:[#allocation9] sm:$0xff]
      %v305 = vld [vmem:[#allocation9 + $0x8] sm:$0xff]
      %v306 = vld [vmem:[#allocation9 + $0x10] sm:$0xff]
      %v307 = vld [vmem:[#allocation9 + $0x18] sm:$0xff]
      %v308 = vld [vmem:[#allocation9 + $0x20] sm:$0xff]
      %v309 = vld [vmem:[#allocation9 + $0x28] sm:$0xff]
      %v310 = vld [vmem:[#allocation9 + $0x30] sm:$0xff]
      %v311 = vld [vmem:[#allocation9 + $0x38] sm:$0xff]
      %v312 = vld [vmem:[#allocation9 + $0x40] sm:$0xff]
      %v313 = vld [vmem:[#allocation9 + $0x48] sm:$0xff]
      %v314 = vld [vmem:[#allocation9 + $0x50] sm:$0xff]
      %v315 = vld [vmem:[#allocation9 + $0x58] sm:$0xff]
      %v316 = vld [vmem:[#allocation9 + $0x60] sm:$0xff]
      %v317 = vld [vmem:[#allocation9 + $0x68] sm:$0xff]
      %v318 = vld [vmem:[#allocation9 + $0x70] sm:$0xff]
      %v319 = vld [vmem:[#allocation9 + $0x78] sm:$0xff]
      %v320 = vld [vmem:[#allocation9 + $0x80] sm:$0xff]
      %v321 = vld [vmem:[#allocation9 + $0x88] sm:$0xff]
      %v322 = vld [vmem:[#allocation9 + $0x90] sm:$0xff]
      %v323 = vld [vmem:[#allocation9 + $0x98] sm:$0xff]
      %v324 = vld [vmem:[#allocation9 + $0xa0] sm:$0xff]
      %v325 = vld [vmem:[#allocation9 + $0xa8] sm:$0xff]
      %v326 = vld [vmem:[#allocation9 + $0xb0] sm:$0xff]
      %v327 = vld [vmem:[#allocation9 + $0xb8] sm:$0xff]
      %v328 = vld [vmem:[#allocation9 + $0xc0] sm:$0xff]
      %v329 = vld [vmem:[#allocation9 + $0xc8] sm:$0xff]
      %v330 = vld [vmem:[#allocation9 + $0xd0] sm:$0xff]
      %v331 = vld [vmem:[#allocation9 + $0xd8] sm:$0xff]
      %v332 = vld [vmem:[#allocation9 + $0xe0] sm:$0xff]
      %v333 = vld [vmem:[#allocation9 + $0xe8] sm:$0xff]
      %v334 = vld [vmem:[#allocation9 + $0xf0] sm:$0xff]
      %v335 = vld [vmem:[#allocation9 + $0xf8] sm:$0xff]
      %v336 = vld [vmem:[%s4] sm:$0x1]
      %v338 = vlaneseq
      %v339 = vshrl.u32 %v338, 7
      %v340 = vsub.s32 0, %v339
      %v341 = vrot.slane %v336, %v340
      %v345 = vunpack.c.l.s4 1983009808
      %v346 = vunpack.c.0.s8 %v345
      %v347 = vlaneseq
      %v348 = vshrl.u32 %v347, 7
      %v349 = vsub.s32 %v346, %v348
      %v350 = vrot.slane %v303, %v349
      %v351 = vcombine.high %v350, %v350
      %354 = vmatprep.subr.mxu0 0.0
      %355 = vmatpush1.msra.mxu0 %v319
      %356 = vmatprep.subr.mxu0 0.0
      %357 = vmatpush1.msra.mxu0 %v318
      %358 = vmatprep.subr.mxu0 0.0
      %359 = vmatpush1.msra.mxu0 %v317
      %360 = vmatprep.subr.mxu0 0.0
      %361 = vmatpush1.msra.mxu0 %v316
      %362 = vmatprep.subr.mxu0 0.0
      %363 = vmatpush1.msra.mxu0 %v315
      %364 = vmatprep.subr.mxu0 0.0
      %365 = vmatpush1.msra.mxu0 %v314
      %366 = vmatprep.subr.mxu0 0.0
      %367 = vmatpush1.msra.mxu0 %v313
      %368 = vmatprep.subr.mxu0 0.0
      %369 = vmatpush1.msra.mxu0 %v312
      %370 = vmatprep.subr.mxu0 0.0
      %371 = vmatpush1.msra.mxu0 %v311
      %372 = vmatprep.subr.mxu0 0.0
      %373 = vmatpush1.msra.mxu0 %v310
      %374 = vmatprep.subr.mxu0 0.0
      %375 = vmatpush1.msra.mxu0 %v309
      %376 = vmatprep.subr.mxu0 0.0
      %377 = vmatpush1.msra.mxu0 %v308
      %378 = vmatprep.subr.mxu0 0.0
      %379 = vmatpush1.msra.mxu0 %v307
      %380 = vmatprep.subr.mxu0 0.0
      %381 = vmatpush1.msra.mxu0 %v306
      %382 = vmatprep.subr.mxu0 0.0
      %383 = vmatpush1.msra.mxu0 %v305
      %384 = vmatprep.subr.mxu0 0.0
      %385 = vmatpush1.msra.mxu0 %v304
      %386 = vmatprep.subr.mxu0 0.0
      %387 = vmatpush2.msra.mxu0 %v335
      %388 = vmatprep.subr.mxu0 0.0
      %389 = vmatpush2.msra.mxu0 %v334
      %390 = vmatprep.subr.mxu0 0.0
      %391 = vmatpush2.msra.mxu0 %v333
      %392 = vmatprep.subr.mxu0 0.0
      %393 = vmatpush2.msra.mxu0 %v332
      %394 = vmatprep.subr.mxu0 0.0
      %395 = vmatpush2.msra.mxu0 %v331
      %396 = vmatprep.subr.mxu0 0.0
      %397 = vmatpush2.msra.mxu0 %v330
      %398 = vmatprep.subr.mxu0 0.0
      %399 = vmatpush2.msra.mxu0 %v329
      %400 = vmatprep.subr.mxu0 0.0
      %401 = vmatpush2.msra.mxu0 %v328
      %402 = vmatprep.subr.mxu0 0.0
      %403 = vmatpush2.msra.mxu0 %v327
      %404 = vmatprep.subr.mxu0 0.0
      %405 = vmatpush2.msra.mxu0 %v326
      %406 = vmatprep.subr.mxu0 0.0
      %407 = vmatpush2.msra.mxu0 %v325
      %408 = vmatprep.subr.mxu0 0.0
      %409 = vmatpush2.msra.mxu0 %v324
      %410 = vmatprep.subr.mxu0 0.0
      %411 = vmatpush2.msra.mxu0 %v323
      %412 = vmatprep.subr.mxu0 0.0
      %413 = vmatpush2.msra.mxu0 %v322
      %414 = vmatprep.subr.mxu0 0.0
      %415 = vmatpush2.msra.mxu0 %v321
      %416 = vmatprep.subr.mxu0 0.0
      %417 = vmatpush2.msra.mxu0 %v320
      %418 = vmatprep.mubr.f32.mxu0 %v351
      %419 = vmatmul.mubr.f32.gmra.mxu0 %v350
      %v420 = vpop.f32.mrf.mxu0
      %v421 = vadd.f32 %v341, %v420
      %v422 = vpop.f32.mrf.mxu0
      %423 = vdwg.mxu0
      %424 = vst [vmem:[#allocation11] sm:$0x3] %v421
    $region45: #{tpu_custom_call.1} parent=1 // pred_fallthru
      _
    // Predicated region
    $region46: #{tpu_custom_call.1} parent=1 // pred_check
      _
    $region47: #{tpu_custom_call.1} parent=1 // pred_check_branch
      %426 = sbr.rel (0) target = $region49
    $region48: #{tpu_custom_call.1} parent=1 // pred_region
      %s428 = ssub.s32 32, 32
      %429 = vsyncadd [#allocation5], %s428
      %s431 = sshll.u32 [#allocation11], 4
      %s432 = int_to_ptr.vmem [resolvable:$true] %s431
      %434 = dma.vmem_to_hbm [thread:$0]  %s432, 32, %s5, [#allocation5]
    $region49: #{tpu_custom_call.1} parent=1 // pred_fallthru
      _
    // Predicated region
    $region50: #{tpu_custom_call.1} parent=1 // pred_check
      _
    $region51: #{tpu_custom_call.1} parent=1 // pred_check_branch
      %436 = sbr.rel (0) target = $region53
    $region52: #{tpu_custom_call.1} parent=1 // pred_region
      %437 = dma.done [#allocation5], 32
    $region53: #{tpu_custom_call.1} parent=1 // pred_fallthru
      _
    %438 = vsyncpa [#allocation4], 1
    %439 = vsyncpa [#allocation7], 1
    %440 = vsyncpa [#allocation10], 1
    %441 = vsyncpa [#allocation5], 1

</llo_original>
